<compile_context>
chip_gen: v5e
topology: v5e:2x2
jax: 0.10.0
libtpu: 0.0.40
codegen_flags: <defaults>
</compile_context>

<pallas_src>
import functools

import jax
import jax.numpy as jnp
from jax import lax
from jax.experimental import pallas as pl
from jax.experimental.pallas import tpu as pltpu

NEG = -1.0e30  # finite stand-in for -inf (avoids NaN from inf-inf / inf*0)


# -----------------------------------------------------------------------------
# Kernel 1: fused flow sums -> [sum(log_s*mask), sum((z*mask)^2)], batch-blocked
# -----------------------------------------------------------------------------
def _flow_sums_kernel(z_ref, ls_ref, m_ref, o_ref):
    i = pl.program_id(0)
    m = m_ref[...].astype(jnp.float32)           # (Bblk, 1, T)
    z = z_ref[...].astype(jnp.float32) * m       # (Bblk, Cz, T)
    ls = ls_ref[...].astype(jnp.float32) * m     # (Bblk, Cs, T)

    @pl.when(i == 0)
    def _():
        o_ref[0] = 0.0
        o_ref[1] = 0.0

    o_ref[0] += jnp.sum(ls)
    o_ref[1] += jnp.sum(z * z)


def flow_sums(z, log_s_all, mask):
    """z: (B,Cz,T), log_s_all: (B,Cs,T), mask: (B,1,T) ->
       (sum(log_s*mask), sum((z*mask)**2)), one pallas_call."""
    B, Cz, T = z.shape
    _, Cs, _ = log_s_all.shape
    # Largest batch block dividing B whose (double-buffered) working set fits ~8 MiB.
    per_b = (Cz + Cs + 1) * T * 4
    bblk = 1
    for cand in range(B, 0, -1):
        if B % cand == 0 and 2 * cand * per_b <= (8 << 20):
            bblk = cand
            break
    sums = pl.pallas_call(
        _flow_sums_kernel,
        out_shape=jax.ShapeDtypeStruct((2,), jnp.float32),
        grid_spec=pltpu.PrefetchScalarGridSpec(
            num_scalar_prefetch=0,
            grid=(B // bblk,),
            in_specs=[
                pl.BlockSpec((bblk, Cz, T), lambda i: (i, 0, 0)),
                pl.BlockSpec((bblk, Cs, T), lambda i: (i, 0, 0)),
                pl.BlockSpec((bblk, 1, T), lambda i: (i, 0, 0)),
            ],
            out_specs=pl.BlockSpec(memory_space=pltpu.MemorySpace.SMEM),
        ),
        compiler_params=pltpu.CompilerParams(dimension_semantics=("arbitrary",)),
    )(z, log_s_all, mask)
    return sums[0], sums[1]


# -----------------------------------------------------------------------------
# Kernel 2: masked regression sums (MSE or BCE-with-logits) + mask.sum()
# -----------------------------------------------------------------------------
def _masked_reg_kernel(use_bce, xh_ref, x_ref, m_ref, o_ref):
    m = m_ref[...].astype(jnp.float32)
    xh = xh_ref[...].astype(jnp.float32) * m
    x = x_ref[...].astype(jnp.float32) * m
    if use_bce:
        # binary_cross_entropy_with_logits, reduction='sum' (inputs pre-masked,
        # exactly like the PyTorch reference).
        l = jnp.maximum(xh, 0.0) - xh * x + jnp.log(1.0 + jnp.exp(-jnp.abs(xh)))
    else:
        d = xh - x
        l = d * d
    o_ref[0] = jnp.sum(l)
    o_ref[1] = jnp.sum(m)


def masked_regression_sums(x_hat, x, mask, use_bce):
    # TODO(synk): fuse the four tiny attribute-loss launches into one pallas_call
    # (or plain XLA) to amortize per-launch overhead; each operates on a few KB.
    B, C, T = x_hat.shape
    if C == 1 and T % 8 == 0:
        # sublane-dense layout for C==1 tensors (identical reshape on all three,
        # so masked elementwise sums are preserved).
        x_hat = x_hat.reshape(B, 8, T // 8)
        x = x.reshape(B, 8, T // 8)
        mask = mask.reshape(B, 8, T // 8)
    full = pl.BlockSpec(x_hat.shape, lambda i: (0, 0, 0))
    mspec = pl.BlockSpec(mask.shape, lambda i: (0, 0, 0))
    kernel = functools.partial(_masked_reg_kernel, use_bce)
    sums = pl.pallas_call(
        kernel,
        out_shape=jax.ShapeDtypeStruct((2,), jnp.float32),
        grid_spec=pltpu.PrefetchScalarGridSpec(
            num_scalar_prefetch=0,
            grid=(1,),
            in_specs=[full, full, mspec],
            out_specs=pl.BlockSpec(memory_space=pltpu.MemorySpace.SMEM),
        ),
        compiler_params=pltpu.CompilerParams(dimension_semantics=("arbitrary",)),
    )(x_hat, x, mask)
    return sums


# -----------------------------------------------------------------------------
# Kernel 3: Attention CTC loss — T-chunked, batch-vectorized two-track DP
#   masked log-softmax per chunk -> two-track CTC forward with pltpu.roll lane
#   shifts, per-row length freeze, alpha carried in VMEM scratch across chunks.
# -----------------------------------------------------------------------------
def _ctc_kernel(t_chunk, tmax_sm, attn_ref, lens_ref, cost_ref,
                a_ref, b_ref, lp_ref):
    g = pl.program_id(0)
    tc = pl.program_id(1)
    _, BB, Kp_pad = attn_ref.shape

    lens = lens_ref[...]                          # (BB, 2) int32
    k_len = lens[:, 0:1]                          # target lengths
    q_len = lens[:, 1:2]                          # input (query) lengths
    j_idx = lax.broadcasted_iota(jnp.int32, (BB, Kp_pad), 1)

    @pl.when(tc == 0)
    def _init():
        # Virtual pre-frame state: "blank, 0 labels emitted" has log-prob 0.
        b_ref[...] = jnp.where(j_idx == 0, 0.0, NEG)
        a_ref[...] = jnp.full((BB, Kp_pad), NEG, jnp.float32)

    t0 = tc * t_chunk
    tmax = tmax_sm[g]

    @pl.when(t0 < tmax)
    def _compute():
        # ---- masked log-softmax over classes 0..k_len (blank + valid keys) ----
        raw = attn_ref[...].astype(jnp.float32)                       # (TC, BB, Kp_pad)
        cls = lax.broadcasted_iota(jnp.int32, (1, BB, Kp_pad), 2)
        valid_c = cls <= k_len.reshape(1, BB, 1)
        raw_m = jnp.where(valid_c, raw, NEG)
        mx = jnp.max(raw_m, axis=2, keepdims=True)
        se = jnp.sum(jnp.where(valid_c, jnp.exp(raw_m - mx), 0.0),
                     axis=2, keepdims=True)
        lp_ref[...] = raw - (mx + jnp.log(se))
        # NOTE: lanes with class > k_len hold garbage log-probs; they only ever
        # feed label positions j > k_len (shifts move j-1 -> j), which never flow
        # back into valid lanes and are never selected at the end.

        lane_ge1 = j_idx >= 1

        # ---- two-track CTC forward:
        #   a[j]: last output at t is label j;  b[j]: output at t is blank, j done.
        def body(t, carry):
            a, b = carry
            lp_t = lp_ref[t]                                          # (BB, Kp_pad)
            blank_t = lp_t[:, 0:1]                                    # (BB, 1)
            a_sh = jnp.where(lane_ge1, pltpu.roll(a, 1, 1), NEG)      # a[j-1]
            b_sh = jnp.where(lane_ge1, pltpu.roll(b, 1, 1), NEG)      # b[j-1]
            mb = jnp.maximum(a, b)
            b_new = mb + jnp.log(jnp.exp(a - mb) + jnp.exp(b - mb)) + blank_t
            ma = jnp.maximum(a, jnp.maximum(a_sh, b_sh))
            a_new = ma + jnp.log(jnp.exp(a - ma) + jnp.exp(a_sh - ma)
                                 + jnp.exp(b_sh - ma)) + lp_t
            live = (t0 + t) < q_len                                   # per-row freeze
            return jnp.where(live, a_new, a), jnp.where(live, b_new, b)

        a, b = lax.fori_loop(0, t_chunk, body, (a_ref[...], b_ref[...]), unroll=2)
        a_ref[...] = a
        b_ref[...] = b

    @pl.when(tc == pl.num_programs(1) - 1)
    def _finalize():
        a = a_ref[...]
        b = b_ref[...]
        sel = j_idx == k_len
        m = jnp.maximum(jnp.max(jnp.where(sel, a, NEG), axis=1, keepdims=True),
                        jnp.max(jnp.where(sel, b, NEG), axis=1, keepdims=True))
        ll = m + jnp.log(
            jnp.sum(jnp.where(sel, jnp.exp(a - m), 0.0), axis=1, keepdims=True)
            + jnp.sum(jnp.where(sel, jnp.exp(b - m), 0.0), axis=1, keepdims=True))
        nll = -ll
        # nn.CTCLoss(reduction='mean', zero_infinity=True) on a batch of 1:
        # nll / target_len, "infinite" (threshold derived from NEG) -> 0.
        k_f = jnp.maximum(k_len, 1).astype(jnp.float32)
        cost_ref[...] = jnp.where(nll > (-0.5 * NEG), 0.0, nll / k_f)


def attention_ctc_loss(attn_logprob, in_lens, out_lens, blank_logprob=-1.0):
    """attn_logprob: (B, 1, T_query, K_keys); matches AttentionCTCLoss.forward."""
    B, _, T, K = attn_logprob.shape
    Kp = K + 1                                    # class 0 = blank
    Kp_pad = 128 * pl.cdiv(Kp, 128)
    # More rows per step hide the serial-DP latency on v5e/v6e; keep >=2 batch
    # blocks so the "parallel" axis still splits across v7x's two TensorCores.
    BB = 16 if B >= 32 else 8
    B_pad = BB * pl.cdiv(B, BB)
    G = B_pad // BB
    T_CHUNK = T if T <= 128 else 128
    NC = pl.cdiv(T, T_CHUNK)
    T_pad = T_CHUNK * NC

    # Single transpose + single fused pad (blank prepend + class/batch/T padding).
    # TODO(synk): fold this reorder fully into the kernel (read raw (BB,T_CHUNK,K)
    # blocks and transpose in VMEM) to drop the remaining pre-kernel HBM pass.
    attn_t = jnp.transpose(attn_logprob[:, 0], (1, 0, 2))             # (T, B, K)
    attn_t = jnp.pad(attn_t,
                     ((0, T_pad - T), (0, B_pad - B), (1, Kp_pad - Kp)),
                     constant_values=float(blank_logprob))            # (T_pad, B_pad, Kp_pad)

    k_lens = jnp.clip(in_lens.astype(jnp.int32), 0, K)
    q_lens = jnp.clip(out_lens.astype(jnp.int32), 0, T)
    k_pad = jnp.pad(k_lens, (0, B_pad - B), constant_values=1)
    q_pad = jnp.pad(q_lens, (0, B_pad - B), constant_values=1)
    lens2 = jnp.stack([k_pad, q_pad], axis=1)                         # (B_pad, 2)
    tmax_blocks = jnp.maximum(jnp.max(q_pad.reshape(G, BB), axis=1), 1)  # (G,)

    itemsize = jnp.dtype(attn_t.dtype).itemsize
    chunk = T_CHUNK * BB * Kp_pad
    vmem_est = (2 * chunk * itemsize        # attn chunk, double buffered
                + chunk * 4                 # lp scratch
                + 4 * chunk * 4             # live f32 temporaries (softmax)
                + 4 * BB * Kp_pad * 4       # a/b carry + rolled copies
                + (2 << 20))
    try:
        vmem_cap = int(pltpu.get_tpu_info().vmem_capacity_bytes)
    except Exception:
        vmem_cap = 64 << 20
    vmem_limit = int(min(max(vmem_est, 8 << 20), vmem_cap * 3 // 4))

    def attn_index_map(g, tc, tmax_sm):
        # Chunks past this block's max query length re-use the last needed block
        # index, so Pallas issues no DMA for them (compute also skipped in-kernel).
        last_needed = (tmax_sm[g] - 1) // T_CHUNK
        return (jnp.minimum(tc, last_needed), g, 0)

    kernel = functools.partial(_ctc_kernel, T_CHUNK)
    costs = pl.pallas_call(
        kernel,
        out_shape=jax.ShapeDtypeStruct((B_pad, 1), jnp.float32),
        grid_spec=pltpu.PrefetchScalarGridSpec(
            num_scalar_prefetch=1,
            grid=(G, NC),
            in_specs=[
                # TODO(synk): sweep pipeline_mode=pl.Buffered(3) here on v7x once
                # chunk sizes are tuned for production shapes.
                pl.BlockSpec((T_CHUNK, BB, Kp_pad), attn_index_map),
                pl.BlockSpec((BB, 2), lambda g, tc, tmax_sm: (g, 0)),
            ],
            out_specs=pl.BlockSpec((BB, 1), lambda g, tc, tmax_sm: (g, 0)),
            scratch_shapes=[
                pltpu.VMEM((BB, Kp_pad), jnp.float32),           # a (label track)
                pltpu.VMEM((BB, Kp_pad), jnp.float32),           # b (blank track)
                pltpu.VMEM((T_CHUNK, BB, Kp_pad), jnp.float32),  # chunk log-probs
            ],
        ),
        compiler_params=pltpu.CompilerParams(
            dimension_semantics=("parallel", "arbitrary"),
            vmem_limit_bytes=vmem_limit,
        ),
    )(tmax_blocks, attn_t, lens2)
    return jnp.mean(costs[:B, 0])


# -----------------------------------------------------------------------------
# Loss compositions mirroring the PyTorch module (glue in plain JAX)
# -----------------------------------------------------------------------------
def get_mask_from_lengths(lengths, max_len):
    ids = jnp.arange(max_len, dtype=jnp.int32)[None, :]
    return ids < lengths[:, None]


def compute_flow_loss(z, log_det_W_list, log_s_list, n_elements, n_dims, mask, sigma=1.0):
    if len(log_s_list):
        log_s_all = (log_s_list[0] if len(log_s_list) == 1
                     else jnp.concatenate(log_s_list, axis=1))
    else:
        log_s_all = jnp.zeros((z.shape[0], 1, z.shape[2]), z.dtype)
    log_s_total, z_sq = flow_sums(z, log_s_all, mask)

    if len(log_det_W_list):
        log_det_W_total = log_det_W_list[0]
        for w in log_det_W_list[1:]:
            log_det_W_total = log_det_W_total + w
        log_det_W_total = log_det_W_total * n_elements
    else:
        log_det_W_total = jnp.float32(0.0)

    prior_NLL = z_sq / (2.0 * sigma * sigma)
    loss = prior_NLL - log_s_total - log_det_W_total
    denom = (n_elements * n_dims).astype(jnp.float32)
    return loss / denom, prior_NLL / denom


def compute_regression_loss(x_hat, x, mask, name=False):
    x = x[:, None] if x.ndim == 2 else x
    mask = mask[:, None] if mask.ndim == 2 else mask
    assert x.ndim == mask.ndim
    use_bce = (name == 'vpred')
    sums = masked_regression_sums(x_hat, x, mask, use_bce)
    loss = sums[0] / sums[1]
    return {'loss_{}'.format(name): loss}


class AttributePredictionLossJAX:
    def __init__(self, name, model_config, loss_weight, sigma=1.0):
        self.name = name
        self.sigma = sigma
        self.model_name = model_config['name']
        self.loss_weight = loss_weight
        self.n_group_size = model_config.get('hparams', {}).get('n_group_size', 1)

    def __call__(self, model_output, lens):
        if 'z' in model_output:
            T = model_output['z'].shape[-1]
        else:
            T = model_output['x_hat'].shape[-1]
        mask = get_mask_from_lengths(lens // self.n_group_size, T)
        mask = mask[:, None].astype(jnp.float32)
        loss_dict = {}
        if 'z' in model_output:
            n_elements = jnp.sum(lens) // self.n_group_size
            n_dims = model_output['z'].shape[1]
            loss, loss_prior = compute_flow_loss(
                model_output['z'], model_output['log_det_W_list'],
                model_output['log_s_list'], n_elements, n_dims, mask, self.sigma)
            loss_dict = {'loss_{}'.format(self.name): (loss, self.loss_weight),
                         'loss_prior_{}'.format(self.name): (loss_prior, 0.0)}
        elif 'x_hat' in model_output:
            loss_dict = compute_regression_loss(model_output['x_hat'], model_output['x'],
                                                mask, self.name)
            for k, v in loss_dict.items():
                loss_dict[k] = (v, self.loss_weight)
        if len(loss_dict) == 0:
            raise Exception('loss not supported')
        return loss_dict


class RADTTSLossJAX:
    def __init__(self, sigma=1.0, n_group_size=1, dur_model_config=None, f0_model_config=None,
                 energy_model_config=None, vpred_model_config=None, loss_weights=None):
        self.sigma = sigma
        self.n_group_size = n_group_size
        self.loss_weights = loss_weights
        self.blank_logprob = loss_weights.get('blank_logprob', -1)
        self.loss_fns = {}
        if dur_model_config is not None:
            self.loss_fns['duration_model_outputs'] = AttributePredictionLossJAX(
                'duration', dur_model_config, loss_weights['dur_loss_weight'])
        if f0_model_config is not None:
            self.loss_fns['f0_model_outputs'] = AttributePredictionLossJAX(
                'f0', f0_model_config, loss_weights['f0_loss_weight'], sigma=1.0)
        if energy_model_config is not None:
            self.loss_fns['energy_model_outputs'] = AttributePredictionLossJAX(
                'energy', energy_model_config, loss_weights['energy_loss_weight'])
        if vpred_model_config is not None:
            self.loss_fns['vpred_model_outputs'] = AttributePredictionLossJAX(
                'vpred', vpred_model_config, loss_weights['vpred_loss_weight'])

    def __call__(self, model_output, in_lens, out_lens):
        loss_dict = {}
        if len(model_output['z_mel']):
            n_elements = jnp.sum(out_lens) // self.n_group_size
            T = model_output['z_mel'].shape[2]
            mask = get_mask_from_lengths(out_lens // self.n_group_size, T)
            mask = mask[:, None].astype(jnp.float32)
            n_dims = model_output['z_mel'].shape[1]
            loss_mel, loss_prior_mel = compute_flow_loss(
                model_output['z_mel'], model_output['log_det_W_list'],
                model_output['log_s_list'], n_elements, n_dims, mask, self.sigma)
            loss_dict['loss_mel'] = (loss_mel, 1.0)
            loss_dict['loss_prior_mel'] = (loss_prior_mel, 0.0)
        ctc_cost = attention_ctc_loss(model_output['attn_logprob'], in_lens, out_lens,
                                      self.blank_logprob)
        loss_dict['loss_ctc'] = (ctc_cost, self.loss_weights['ctc_loss_weight'])
        for k in model_output:
            if k in self.loss_fns:
                if model_output[k] is not None and len(model_output[k]) > 0:
                    t_lens = in_lens if 'dur' in k else out_lens
                    mout = model_output[k]
                    for loss_name, v in self.loss_fns[k](mout, t_lens).items():
                        loss_dict[loss_name] = v
        return loss_dict


# -----------------------------------------------------------------------------
# Demo
# -----------------------------------------------------------------------------
if __name__ == "__main__":
    key = jax.random.PRNGKey(0)
    keys = jax.random.split(key, 16)

    B = 2
    C_MEL = 16     # z_mel channels
    T_OUT = 16     # mel frames
    T_IN = 8       # text tokens

    out_lens = jnp.array([16, 12], dtype=jnp.int32)
    in_lens = jnp.array([8, 6], dtype=jnp.int32)

    model_output = {
        'z_mel': jax.random.normal(keys[0], (B, C_MEL, T_OUT), jnp.float32),
        'log_det_W_list': [jax.random.normal(keys[1], ()) * 0.1,
                           jax.random.normal(keys[2], ()) * 0.1],
        'log_s_list': [jax.random.normal(keys[3], (B, C_MEL // 2, T_OUT)) * 0.1,
                       jax.random.normal(keys[4], (B, C_MEL // 2, T_OUT)) * 0.1],
        'attn_logprob': jax.random.normal(keys[5], (B, 1, T_OUT, T_IN)),
        'duration_model_outputs': {
            'x_hat': jax.random.normal(keys[6], (B, 1, T_IN)),
            'x': jax.random.uniform(keys[7], (B, T_IN), minval=0.0, maxval=4.0),
        },
        'f0_model_outputs': {
            'z': jax.random.normal(keys[8], (B, 1, T_OUT)),
            'log_det_W_list': [jax.random.normal(keys[9], ()) * 0.1],
            'log_s_list': [jax.random.normal(keys[10], (B, 1, T_OUT)) * 0.1],
        },
        'energy_model_outputs': {
            'x_hat': jax.random.normal(keys[11], (B, 1, T_OUT)),
            'x': jax.random.normal(keys[12], (B, T_OUT)),
        },
        'vpred_model_outputs': {
            'x_hat': jax.random.normal(keys[13], (B, 1, T_OUT)),
            'x': (jax.random.uniform(keys[14], (B, T_OUT)) > 0.5).astype(jnp.float32),
        },
    }

    loss_weights = {'blank_logprob': -1.0, 'ctc_loss_weight': 0.1, 'dur_loss_weight': 1.0,
                    'f0_loss_weight': 1.0, 'energy_loss_weight': 1.0, 'vpred_loss_weight': 1.0}
    cfg = lambda name: {'name': name, 'hparams': {'n_group_size': 1}}

    loss_mod = RADTTSLossJAX(sigma=1.0, n_group_size=1,
                             dur_model_config=cfg('dap'), f0_model_config=cfg('agap'),
                             energy_model_config=cfg('dap'), vpred_model_config=cfg('dap'),
                             loss_weights=loss_weights)

    loss_dict = loss_mod(model_output, in_lens, out_lens)

    for name, (v, w) in loss_dict.items():
        jax.block_until_ready(v)
    total = sum(float(v) * float(w) for v, w in loss_dict.values())
    assert total == total  # not NaN
    print("KERNEL_OK")
</pallas_src>

<mosaic_0001>
module attributes {stable_mosaic.version = 11 : i64} {
  func.func @_flow_sums_kernel(%arg0: i32, %arg1: memref<2x16x16xf32, #tpu.memory_space<vmem>>, %arg2: memref<2x16x16xf32, #tpu.memory_space<vmem>>, %arg3: memref<2x1x16xf32, #tpu.memory_space<vmem>>, %arg4: memref<2xf32, #tpu.memory_space<smem>>) attributes {dimension_semantics = [#tpu.dimension_semantics<arbitrary>], iteration_bounds = array<i64: 1>, scalar_prefetch = 0 : i64, scratch_operands = 0 : i64, tpu.core_type = #tpu.core_type<tc>, window_params = [{transform_indices = @transform_0, window_bounds = array<i64: 2, 16, 16>}, {transform_indices = @transform_1, window_bounds = array<i64: 2, 16, 16>}, {transform_indices = @transform_2, window_bounds = array<i64: 2, 1, 16>}, {transform_indices = @transform_3, window_bounds = array<i64: 2>}]} {
    %c0 = arith.constant 0 : index
    %c0_0 = arith.constant 0 : index
    %c0_1 = arith.constant 0 : index
    %0 = vector.load %arg3[%c0, %c0_0, %c0_1] : memref<2x1x16xf32, #tpu.memory_space<vmem>>, vector<2x1x16xf32>
    %c0_2 = arith.constant 0 : index
    %c0_3 = arith.constant 0 : index
    %c0_4 = arith.constant 0 : index
    %1 = vector.load %arg1[%c0_2, %c0_3, %c0_4] : memref<2x16x16xf32, #tpu.memory_space<vmem>>, vector<2x16x16xf32>
    %2 = vector.broadcast %0 : vector<2x1x16xf32> to vector<2x16x16xf32>
    %3 = arith.mulf %1, %2 : vector<2x16x16xf32>
    %c0_5 = arith.constant 0 : index
    %c0_6 = arith.constant 0 : index
    %c0_7 = arith.constant 0 : index
    %4 = vector.load %arg2[%c0_5, %c0_6, %c0_7] : memref<2x16x16xf32, #tpu.memory_space<vmem>>, vector<2x16x16xf32>
    %5 = vector.broadcast %0 : vector<2x1x16xf32> to vector<2x16x16xf32>
    %6 = arith.mulf %4, %5 : vector<2x16x16xf32>
    %c0_i32 = arith.constant 0 : i32
    %7 = arith.cmpi eq, %arg0, %c0_i32 : i32
    %8 = arith.extui %7 : i1 to i32
    %c0_i32_8 = arith.constant 0 : i32
    %9 = arith.cmpi ne, %8, %c0_i32_8 : i32
    scf.if %9 {
      %cst_13 = arith.constant 0.000000e+00 : f32
      %c0_14 = arith.constant 0 : index
      %25 = memref.load %arg4[%c0_14] : memref<2xf32, #tpu.memory_space<smem>>
      memref.store %cst_13, %arg4[%c0_14] : memref<2xf32, #tpu.memory_space<smem>>
      %cst_15 = arith.constant 0.000000e+00 : f32
      %c1_16 = arith.constant 1 : index
      %26 = memref.load %arg4[%c1_16] : memref<2xf32, #tpu.memory_space<smem>>
      memref.store %cst_15, %arg4[%c1_16] : memref<2xf32, #tpu.memory_space<smem>>
    } else {
    }
    %c0_9 = arith.constant 0 : index
    %10 = memref.load %arg4[%c0_9] : memref<2xf32, #tpu.memory_space<smem>>
    %11 = vector.shape_cast %6 : vector<2x16x16xf32> to vector<1x2x16x16xf32>
    %cst = arith.constant dense<0.000000e+00> : vector<1xf32>
    %12 = vector.multi_reduction <add>, %11, %cst [1, 2, 3] : vector<1x2x16x16xf32> to vector<1xf32>
    %13 = vector.shape_cast %12 : vector<1xf32> to vector<1x1x1x1xf32>
    %14 = vector.extract %13[0, 0, 0, 0] : f32 from vector<1x1x1x1xf32>
    %15 = arith.addf %10, %14 : f32
    %c0_10 = arith.constant 0 : index
    %16 = memref.load %arg4[%c0_10] : memref<2xf32, #tpu.memory_space<smem>>
    memref.store %15, %arg4[%c0_10] : memref<2xf32, #tpu.memory_space<smem>>
    %c1 = arith.constant 1 : index
    %17 = memref.load %arg4[%c1] : memref<2xf32, #tpu.memory_space<smem>>
    %18 = arith.mulf %3, %3 : vector<2x16x16xf32>
    %19 = vector.shape_cast %18 : vector<2x16x16xf32> to vector<1x2x16x16xf32>
    %cst_11 = arith.constant dense<0.000000e+00> : vector<1xf32>
    %20 = vector.multi_reduction <add>, %19, %cst_11 [1, 2, 3] : vector<1x2x16x16xf32> to vector<1xf32>
    %21 = vector.shape_cast %20 : vector<1xf32> to vector<1x1x1x1xf32>
    %22 = vector.extract %21[0, 0, 0, 0] : f32 from vector<1x1x1x1xf32>
    %23 = arith.addf %17, %22 : f32
    %c1_12 = arith.constant 1 : index
    %24 = memref.load %arg4[%c1_12] : memref<2xf32, #tpu.memory_space<smem>>
    memref.store %23, %arg4[%c1_12] : memref<2xf32, #tpu.memory_space<smem>>
    return
  }
  func.func @transform_0(%arg0: i32) -> (i32, i32, i32) {
    %c0_i32 = arith.constant 0 : i32
    %c0_i32_0 = arith.constant 0 : i32
    %c0_i32_1 = arith.constant 0 : i32
    return %arg0, %c0_i32, %c0_i32_0 : i32, i32, i32
  }
  func.func @transform_1(%arg0: i32) -> (i32, i32, i32) {
    %c0_i32 = arith.constant 0 : i32
    %c0_i32_0 = arith.constant 0 : i32
    %c0_i32_1 = arith.constant 0 : i32
    return %arg0, %c0_i32, %c0_i32_0 : i32, i32, i32
  }
  func.func @transform_2(%arg0: i32) -> (i32, i32, i32) {
    %c0_i32 = arith.constant 0 : i32
    %c0_i32_0 = arith.constant 0 : i32
    %c0_i32_1 = arith.constant 0 : i32
    return %arg0, %c0_i32, %c0_i32_0 : i32, i32, i32
  }
  func.func @transform_3(%arg0: i32) -> i32 {
    %c0_i32 = arith.constant 0 : i32
    %c0_i32_0 = arith.constant 0 : i32
    return %c0_i32 : i32
  }
}

</mosaic_0001>

<llo_original>
// kernel: tpu_custom_call.1
$region0: #{tpu_custom_call.1}
  #allocation0 [shape = 'u32[]', space=smem, size = 0x4, offset = 0x4, fixed_abs, tag = 'smem constant byte address 0x4 - core index']
  #allocation1 [shape = 'u32[72,128]{1,0:T(1,128)}', space=vmem, size = 0x9000, scoped, tag = 'internal scratch']
  %s0 = inlined_call_operand.hbm [shape: f32[2,16,16], index: 0, kind: input, shape index: {}]
  %s1 = inlined_call_operand.hbm [shape: f32[2,16,16], index: 1, kind: input, shape index: {}]
  %s2 = inlined_call_operand.hbm [shape: f32[2,1,16], index: 2, kind: input, shape index: {}]
  %s3 = inlined_call_operand.hbm [shape: f32[2], index: 3, kind: output, shape index: {}]
  %s4 = sld [smem:[#allocation0]]
  $region38: #{tpu_custom_call.1} parent=0
    _
  %s6 = ssub.s32 1, %s4
  %s7 = scalar_select 0, %s6, %s4
  $region1: #{tpu_custom_call.1} parent=0
    #allocation2 [shape = 'u8[16384]{0}', space=vmem, size = 0x4000, scoped, tag = 'input window, operand 0, single buffered']
    #allocation3 [shape = 's32[1]{0}', space=sflag, size = 0x4, scoped, tag = 'scoped memory for tpu_custom_call.1']
    #allocation4 [shape = 's32[1]{0}', space=sflag, size = 0x4, scoped, tag = 'scoped memory for tpu_custom_call.1']
    #allocation5 [shape = 'u8[16384]{0}', space=vmem, size = 0x4000, scoped, tag = 'input window, operand 1, single buffered']
    #allocation6 [shape = 's32[1]{0}', space=sflag, size = 0x4, scoped, tag = 'scoped memory for tpu_custom_call.1']
    #allocation7 [shape = 'u8[1024]{0}', space=vmem, size = 0x400, scoped, tag = 'input window, operand 2, single buffered']
    #allocation8 [shape = 'u8[512]{0}', space=smem, size = 0x200, scoped, tag = 'output window, operand 0, single buffered']
    %8 = vsyncpa [#allocation3], 0
    %9 = vsyncpa [#allocation6], 0
    %10 = vsyncpa [#allocation4], 0
    // Predicated region
    $region2: #{tpu_custom_call.1} parent=1 // pred_check
      _
    $region3: #{tpu_custom_call.1} parent=1 // pred_check_branch
      %12 = sbr.rel (0) target = $region5
    $region4: #{tpu_custom_call.1} parent=1 // pred_region
      %14 = vsyncadd [#allocation3], 0
      %s15 = sshll.u32 %s0, 4
      %s16 = int_to_ptr.hbm [resolvable:$true] %s15
      %s17 = sshll.u32 [#allocation2], 4
      %s18 = int_to_ptr.vmem [resolvable:$true] %s17
      %23 = dma.hbm_to_vmem [thread:$0]  %s16, 512, %s18, [#allocation3], 128, 128, 8
    $region5: #{tpu_custom_call.1} parent=1 // pred_fallthru
      _
    // Predicated region
    $region6: #{tpu_custom_call.1} parent=1 // pred_check
      _
    $region7: #{tpu_custom_call.1} parent=1 // pred_check_branch
      %25 = sbr.rel (0) target = $region9
    $region8: #{tpu_custom_call.1} parent=1 // pred_region
      %27 = vsyncadd [#allocation6], 0
      %s28 = sshll.u32 %s1, 4
      %s29 = int_to_ptr.hbm [resolvable:$true] %s28
      %s30 = sshll.u32 [#allocation5], 4
      %s31 = int_to_ptr.vmem [resolvable:$true] %s30
      %36 = dma.hbm_to_vmem [thread:$0]  %s29, 512, %s31, [#allocation6], 128, 128, 8
    $region9: #{tpu_custom_call.1} parent=1 // pred_fallthru
      _
    // Predicated region
    $region10: #{tpu_custom_call.1} parent=1 // pred_check
      _
    $region11: #{tpu_custom_call.1} parent=1 // pred_check_branch
      %38 = sbr.rel (0) target = $region13
    $region12: #{tpu_custom_call.1} parent=1 // pred_region
      %40 = vsyncadd [#allocation6], 0
      %s41 = sshll.u32 %s2, 4
      %s42 = int_to_ptr.hbm [resolvable:$true] %s41
      %s43 = sshll.u32 [#allocation7], 4
      %s44 = int_to_ptr.vmem [resolvable:$true] %s43
      %49 = dma.hbm_to_vmem [thread:$0]  %s42, 32, %s44, [#allocation6], 16, 16, 1
    $region13: #{tpu_custom_call.1} parent=1 // pred_fallthru
      _
    // Predicated region
    $region14: #{tpu_custom_call.1} parent=1 // pred_check
      _
    $region15: #{tpu_custom_call.1} parent=1 // pred_check_branch
      %51 = sbr.rel (0) target = $region17
    $region16: #{tpu_custom_call.1} parent=1 // pred_region
      %53 = dma.done [#allocation3], 512
    $region17: #{tpu_custom_call.1} parent=1 // pred_fallthru
      _
    // Predicated region
    $region18: #{tpu_custom_call.1} parent=1 // pred_check
      _
    $region19: #{tpu_custom_call.1} parent=1 // pred_check_branch
      %55 = sbr.rel (0) target = $region21
    $region20: #{tpu_custom_call.1} parent=1 // pred_region
      %57 = dma.done [#allocation6], 512
    $region21: #{tpu_custom_call.1} parent=1 // pred_fallthru
      _
    // Predicated region
    $region22: #{tpu_custom_call.1} parent=1 // pred_check
      _
    $region23: #{tpu_custom_call.1} parent=1 // pred_check_branch
      %59 = sbr.rel (0) target = $region25
    $region24: #{tpu_custom_call.1} parent=1 // pred_region
      %61 = dma.done [#allocation6], 32
    $region25: #{tpu_custom_call.1} parent=1 // pred_fallthru
      _
    %v62 = vld [vmem:[#allocation7] sm:$0x1]
    %v63 = vld [vmem:[#allocation7 + $0x1] sm:$0x1]
    %v64 = vld [vmem:[#allocation2] sm:$0xff]
    %v65 = vld [vmem:[#allocation2 + $0x8] sm:$0xff]
    %v66 = vld [vmem:[#allocation2 + $0x10] sm:$0xff]
    %v67 = vld [vmem:[#allocation2 + $0x18] sm:$0xff]
    %v70 = vperm.slane %v62, 0
    %v71 = vperm.slane %v63, 0
    %v74 = vmul.f32 %v64, %v70
    %v75 = vmul.f32 %v65, %v70
    %v76 = vmul.f32 %v66, %v71
    %v77 = vmul.f32 %v67, %v71
    %v78 = vld [vmem:[#allocation5] sm:$0xff]
    %v79 = vld [vmem:[#allocation5 + $0x8] sm:$0xff]
    %v80 = vld [vmem:[#allocation5 + $0x10] sm:$0xff]
    %v81 = vld [vmem:[#allocation5 + $0x18] sm:$0xff]
    %v82 = vmul.f32 %v78, %v70
    %v83 = vmul.f32 %v79, %v70
    %v84 = vmul.f32 %v80, %v71
    %v85 = vmul.f32 %v81, %v71
    %p86 = scmp.eq.s32.totalorder 0, 0
    // Predicated region
    $region26: #{tpu_custom_call.1} parent=1 // pred_check
      %p87 = pneg %p86
    $region27: #{tpu_custom_call.1} parent=1 // pred_check_branch
      %89 = sbr.rel (%p87) target = $region29
    $region28: #{tpu_custom_call.1} parent=1 // pred_region
      %s90 = scalar_lea.smem [#allocation8], 0
      %91 = sst [smem:[%s90]] 0.0
      %s92 = scalar_lea.smem [#allocation8], 1
      %93 = sst [smem:[%s92]] 0.0
    $region29: #{tpu_custom_call.1} parent=1 // pred_fallthru
      _
    %s94 = sld [smem:[#allocation8]]
    %vm95 = vcmask 130048
    %v96 = vsel %vm95, %v82, 0.0
    %v97 = vsel %vm95, %v83, 0.0
    %v98 = vadd.f32 %v96, %v97
    %v99 = vsel %vm95, %v84, 0.0
    %v100 = vadd.f32 %v98, %v99
    %v101 = vsel %vm95, %v85, 0.0
    %v102 = vadd.f32 %v100, %v101
    %103 = vadd.xlane.f32.xlu0 %v102
    %v104 = vpop.xlane.xlu0 %103
    %v105 = vrot.slane %v104, 4
    %v106 = vadd.f32 %v104, %v105
    %v107 = vrot.slane %v106, 2
    %v108 = vadd.f32 %v106, %v107
    %v109 = vrot.slane %v108, 1
    %v110 = vadd.f32 %v108, %v109
    %s111 = vtos %v110
    %s112 = sadd.f32 %s94, %s111
    %s113 = scalar_lea.smem [#allocation8], 0
    %114 = sst [smem:[%s113]] %s112
    %s115 = sld [smem:[#allocation8 + $0x1]]
    %v116 = vmul.f32 %v74, %v74
    %v117 = vmul.f32 %v75, %v75
    %v118 = vmul.f32 %v76, %v76
    %v119 = vmul.f32 %v77, %v77
    %v120 = vsel %vm95, %v116, 0.0
    %v121 = vsel %vm95, %v117, 0.0
    %v122 = vadd.f32 %v120, %v121
    %v123 = vsel %vm95, %v118, 0.0
    %v124 = vadd.f32 %v122, %v123
    %v125 = vsel %vm95, %v119, 0.0
    %v126 = vadd.f32 %v124, %v125
    %127 = vadd.xlane.f32.xlu0 %v126
    %v128 = vpop.xlane.xlu0 %127
    %v129 = vrot.slane %v128, 4
    %v130 = vadd.f32 %v128, %v129
    %v131 = vrot.slane %v130, 2
    %v132 = vadd.f32 %v130, %v131
    %v133 = vrot.slane %v132, 1
    %v134 = vadd.f32 %v132, %v133
    %s135 = vtos %v134
    %s136 = sadd.f32 %s115, %s135
    %s137 = scalar_lea.smem [#allocation8], 1
    %138 = sst [smem:[%s137]] %s136
    // Predicated region
    $region30: #{tpu_custom_call.1} parent=1 // pred_check
      _
    $region31: #{tpu_custom_call.1} parent=1 // pred_check_branch
      %140 = sbr.rel (0) target = $region33
    $region32: #{tpu_custom_call.1} parent=1 // pred_region
      %142 = vsyncadd [#allocation4], 0
      %s144 = sshll.u32 %s3, 4
      %s145 = int_to_ptr.hbm [resolvable:$true] %s144
      %147 = dma.smem_to_hbm [#allocation8], 16, %s145, [#allocation4]
    $region33: #{tpu_custom_call.1} parent=1 // pred_fallthru
      _
    // Predicated region
    $region34: #{tpu_custom_call.1} parent=1 // pred_check
      _
    $region35: #{tpu_custom_call.1} parent=1 // pred_check_branch
      %149 = sbr.rel (0) target = $region37
    $region36: #{tpu_custom_call.1} parent=1 // pred_region
      %151 = dma.done [#allocation4], 16
    $region37: #{tpu_custom_call.1} parent=1 // pred_fallthru
      _
    %152 = sfence
    %153 = vsyncpa [#allocation3], 1
    %154 = vsyncpa [#allocation6], 1
    %155 = vsyncpa [#allocation4], 1

</llo_original>
